<compile_context>
chip_gen: v7x
topology: tpu7x:2x2x1
jax: 0.10.0
libtpu: 0.0.40
codegen_flags: <defaults>
</compile_context>

<pallas_src>
import functools

import jax
import jax.numpy as jnp
from jax.experimental import pallas as pl
from jax.experimental.pallas import tpu as pltpu


def _ffn_residual_kernel(x_ref, w1_ref, b1_ref, w2_ref, b2_ref, o_ref, xbf_ref,
                         *, th, resident):
    """One (token-tile, hidden-chunk) step of out = GELU(x@W1 + b1)@W2 + b2 + x.

    The output block index is constant over k, so o_ref doubles as the f32
    accumulator (seeded with the residual at k == 0, bias-finalized at the
    last k).  x is cast to bf16 once per token tile into xbf_ref.
    """
    k = pl.program_id(1)

    @pl.when(k == 0)
    def _init():
        x = x_ref[...]                         # f32 (tm, D), read once per token tile
        xbf_ref[...] = x.astype(jnp.bfloat16)  # cached bf16 copy for the MXU
        o_ref[...] = x                         # seed accumulator with the residual

    if resident:
        # Full W1/W2 live in VMEM for the whole grid (constant block index);
        # slice this hidden chunk out of the resident copy.
        off = pl.multiple_of(k * th, 128)
        w1 = w1_ref[:, pl.ds(off, th)]         # (D, th) bf16
        b1 = b1_ref[:, pl.ds(off, th)]         # (1, th) f32
        w2 = w2_ref[pl.ds(off, th), :]         # (th, D) bf16
    else:
        w1 = w1_ref[...]
        b1 = b1_ref[...]
        w2 = w2_ref[...]

    # _forward(x), one hidden chunk: Linear -> GELU -> Linear (f32 accumulation).
    h = jnp.dot(xbf_ref[...], w1, preferred_element_type=jnp.float32)
    h = h + b1
    # TODO(synk): tanh-GELU here; swap to jax.nn.gelu(h, approximate=False) if
    # exact parity with torch.nn.GELU() (erf) is required.
    h = jax.nn.gelu(h, approximate=True)
    o_ref[...] += jnp.dot(h.astype(jnp.bfloat16), w2,
                          preferred_element_type=jnp.float32)

    @pl.when(k == pl.num_programs(1) - 1)
    def _finalize():
        o_ref[...] += b2_ref[...]


def _chip_config():
    """Generation-aware (tm, th, vmem_limit_bytes, two_tensorcores)."""
    kind = ""
    try:
        kind = jax.devices()[0].device_kind.lower()
    except Exception:
        pass
    try:
        vmem_bytes = int(pltpu.get_tpu_info().vmem_capacity_bytes)
    except Exception:
        vmem_bytes = 64 * 1024 * 1024 if "v7" in kind else 128 * 1024 * 1024

    two_tc = "v7" in kind
    if two_tc or vmem_bytes <= 64 * 1024 * 1024:
        # v7x: MXU/HBM crossover ~310 flop per weight byte; 64 MiB physical VMEM,
        # so leave headroom for compiler-internal scratch (do NOT use all 64 MiB).
        tm, th = 512, 256
        vmem_limit = min(vmem_bytes, 64 * 1024 * 1024) - 12 * 1024 * 1024
    elif "v6" in kind:
        # v6e: crossover ~650 flop per weight byte -> big token tiles; 128 MiB VMEM.
        tm, th = 1024, 256
        vmem_limit = min(vmem_bytes - 16 * 1024 * 1024, 112 * 1024 * 1024)
    else:
        # v5e / unknown: crossover ~240 flop/B, tm 256-384 is already near balance.
        tm, th = 384, 512
        vmem_limit = min(vmem_bytes - 16 * 1024 * 1024, 100 * 1024 * 1024)
    return tm, th, max(int(vmem_limit), 32 * 1024 * 1024), two_tc


def base_feed_forward(x, w1, b1, w2, b2, *, tm=None, th=None, force_streaming=False):
    """x: (B, S, D) f32. Returns (B, S, D) = GELU-MLP(x) + x (fused Pallas kernel).

    Weights should be pre-cast to bf16 once at parameter init (avoids rewriting
    bf16 copies to HBM on every forward); the wrapper casts only as a fallback.
    """
    B, S, D = x.shape
    H = w1.shape[1]
    M = B * S
    assert x.dtype == jnp.float32, "f32 output block is used as the accumulator"
    assert D % 128 == 0, "pad/fold D to a multiple of 128 before calling the kernel"

    if w1.dtype != jnp.bfloat16:
        w1 = w1.astype(jnp.bfloat16)   # fallback; prefer pre-cast at init
    if w2.dtype != jnp.bfloat16:
        w2 = w2.astype(jnp.bfloat16)
    b1 = b1.reshape(1, H).astype(jnp.float32)
    b2 = b2.reshape(1, D).astype(jnp.float32)

    d_tm, d_th, vmem_limit, two_tc = _chip_config()
    tm = d_tm if tm is None else tm
    th = d_th if th is None else th
    tm = min(tm, M)
    th = min(th, H)
    while M % tm:
        tm //= 2
    while H % th:
        th //= 2
    # Keep both TensorCores busy on dual-TC chips (v7x): need >= 2 token tiles.
    if two_tc and M // tm < 2 and tm % 16 == 0:
        tm //= 2

    def fits(weight_bytes, tm_, th_):
        xo = 2 * (2 * tm_ * D * 4) + tm_ * D * 2   # x + out (double-buffered) + xbf
        inter = tm_ * th_ * 6                       # f32 + bf16 hidden-chunk temps
        return weight_bytes + xo + inter <= int(0.85 * vmem_limit)

    # Weight-resident variant: full bf16 W1/W2 stay in VMEM for the whole grid.
    resident_bytes = 2 * (w1.size * 2 + w2.size * 2)     # conservatively 2 buffers
    resident = (not force_streaming) and fits(resident_bytes, tm, th)

    if not resident:
        stream_bytes = lambda th_: 2 * (D * th_ * 2 + th_ * D * 2)
        while not fits(stream_bytes(th), tm, th) and tm > 64 and tm % 16 == 0:
            tm //= 2
        while not fits(stream_bytes(th), tm, th) and th > 128 and (th // 2) % 128 == 0:
            th //= 2

    assert M % tm == 0 and tm % 8 == 0
    assert H % th == 0 and th % 128 == 0

    grid = (M // tm, H // th)
    x2d = x.reshape(M, D)

    if resident:
        w1_spec = pl.BlockSpec((D, H), lambda i, k: (0, 0))   # resident, 1 HBM pass
        b1_spec = pl.BlockSpec((1, H), lambda i, k: (0, 0))
        w2_spec = pl.BlockSpec((H, D), lambda i, k: (0, 0))
        weight_passes = 1
    else:
        w1_spec = pl.BlockSpec((D, th), lambda i, k: (0, k))  # streamed per chunk
        b1_spec = pl.BlockSpec((1, th), lambda i, k: (0, k))
        w2_spec = pl.BlockSpec((th, D), lambda i, k: (k, 0))
        weight_passes = M // tm

    cost = pl.CostEstimate(
        flops=4 * M * D * H,                                   # two matmuls
        transcendentals=M * H,                                 # tanh-GELU
        bytes_accessed=(x2d.size * 4 + M * D * 4
                        + weight_passes * (w1.size * 2 + w2.size * 2)
                        + (b1.size + b2.size) * 4),
    )

    kernel = functools.partial(_ffn_residual_kernel, th=th, resident=resident)

    out2d = pl.pallas_call(
        kernel,
        out_shape=jax.ShapeDtypeStruct((M, D), x.dtype),
        grid_spec=pltpu.PrefetchScalarGridSpec(
            num_scalar_prefetch=0,
            grid=grid,
            in_specs=[
                pl.BlockSpec((tm, D), lambda i, k: (i, 0)),    # x tile (resident over k)
                w1_spec, b1_spec, w2_spec,
                pl.BlockSpec((1, D), lambda i, k: (0, 0)),     # b2 (resident)
            ],
            out_specs=pl.BlockSpec((tm, D), lambda i, k: (i, 0)),
            scratch_shapes=[pltpu.VMEM((tm, D), jnp.bfloat16)],  # cached bf16 x tile
        ),
        compiler_params=pltpu.CompilerParams(
            dimension_semantics=("parallel", "arbitrary"),
            vmem_limit_bytes=int(vmem_limit),
        ),
        cost_estimate=cost,
    )(x2d, w1, b1, w2, b2)

    out = out2d.reshape(B, S, D)
    assert out.shape == x.shape   # mirrors the PyTorch size assertion
    return out


if __name__ == "__main__":
    # Small but lane-dense shapes: D = 128 (one full lane width), H = 4*D.
    B, S, D = 2, 32, 128
    H = 4 * D

    key = jax.random.PRNGKey(0)
    kx, k1, k2, k3, k4 = jax.random.split(key, 5)

    x = jax.random.normal(kx, (B, S, D), dtype=jnp.float32)
    w1 = jax.random.normal(k1, (D, H), dtype=jnp.float32) * (1.0 / jnp.sqrt(D))
    b1 = jax.random.normal(k2, (1, H), dtype=jnp.float32) * 0.01
    w2 = jax.random.normal(k3, (H, D), dtype=jnp.float32) * (1.0 / jnp.sqrt(H))
    b2 = jax.random.normal(k4, (1, D), dtype=jnp.float32) * 0.01

    # Pre-cast weights ONCE (parameter-init time), not inside the forward call.
    w1_bf = w1.astype(jnp.bfloat16)
    w2_bf = w2.astype(jnp.bfloat16)

    # Weight-resident path (auto-selected: small weights fit comfortably in VMEM).
    out_res = jax.block_until_ready(base_feed_forward(x, w1_bf, b1, w2_bf, b2))
    # Weight-streaming path (forced, small tiles -> multi-step grid in both axes).
    out_str = jax.block_until_ready(
        base_feed_forward(x, w1_bf, b1, w2_bf, b2, tm=32, th=128,
                          force_streaming=True))

    # Reference with matching numerics (bf16 matmul operands, f32 accumulation,
    # f32 bias/GELU/residual) — same semantics as _forward(x) + x.
    x2d = x.reshape(B * S, D)
    h_ref = jnp.dot(x2d.astype(jnp.bfloat16), w1_bf,
                    preferred_element_type=jnp.float32) + b1
    h_ref = jax.nn.gelu(h_ref, approximate=True)
    ref2d = jnp.dot(h_ref.astype(jnp.bfloat16), w2_bf,
                    preferred_element_type=jnp.float32) + b2 + x2d
    ref = ref2d.reshape(B, S, D)

    assert out_res.shape == x.shape and out_str.shape == x.shape
    assert jnp.allclose(out_res, ref, atol=2e-3, rtol=2e-3)
    assert jnp.allclose(out_str, ref, atol=2e-3, rtol=2e-3)

    print("KERNEL_OK")
</pallas_src>

<mosaic_0001>
module attributes {stable_mosaic.version = 11 : i64} {
  func.func @_ffn_residual_kernel(%arg0: i32, %arg1: i32, %arg2: memref<64x128xf32, #tpu.memory_space<vmem>>, %arg3: memref<128x512xbf16, #tpu.memory_space<vmem>>, %arg4: memref<1x512xf32, #tpu.memory_space<vmem>>, %arg5: memref<512x128xbf16, #tpu.memory_space<vmem>>, %arg6: memref<1x128xf32, #tpu.memory_space<vmem>>, %arg7: memref<64x128xf32, #tpu.memory_space<vmem>>, %arg8: memref<64x128xbf16, #tpu.memory_space<vmem>>) attributes {dimension_semantics = [#tpu.dimension_semantics<parallel>, #tpu.dimension_semantics<arbitrary>], iteration_bounds = array<i64: 1, 1>, scalar_prefetch = 0 : i64, scratch_operands = 1 : i64, tpu.core_type = #tpu.core_type<tc>, window_params = [{transform_indices = @transform_0, window_bounds = array<i64: 64, 128>}, {pipeline_mode = #tpu.pipeline_mode<synchronous>, transform_indices = @transform_1, window_bounds = array<i64: 128, 512>}, {pipeline_mode = #tpu.pipeline_mode<synchronous>, transform_indices = @transform_2, window_bounds = array<i64: 1, 512>}, {pipeline_mode = #tpu.pipeline_mode<synchronous>, transform_indices = @transform_3, window_bounds = array<i64: 512, 128>}, {pipeline_mode = #tpu.pipeline_mode<synchronous>, transform_indices = @transform_4, window_bounds = array<i64: 1, 128>}, {transform_indices = @transform_5, window_bounds = array<i64: 64, 128>}]} {
    %c0_i32 = arith.constant 0 : i32
    %0 = arith.cmpi eq, %arg1, %c0_i32 : i32
    %1 = arith.extui %0 : i1 to i32
    %c0_i32_0 = arith.constant 0 : i32
    %2 = arith.cmpi ne, %1, %c0_i32_0 : i32
    scf.if %2 {
      %c0_16 = arith.constant 0 : index
      %c0_17 = arith.constant 0 : index
      %36 = vector.load %arg2[%c0_16, %c0_17] : memref<64x128xf32, #tpu.memory_space<vmem>>, vector<64x128xf32>
      %37 = arith.truncf %36 : vector<64x128xf32> to vector<64x128xbf16>
      %c0_18 = arith.constant 0 : index
      %c0_19 = arith.constant 0 : index
      %38 = vector.load %arg8[%c0_18, %c0_19] : memref<64x128xbf16, #tpu.memory_space<vmem>>, vector<64x128xbf16>
      tpu.vector_store %arg8[%c0_18, %c0_19], %37 {strides = array<i32>} : memref<64x128xbf16, #tpu.memory_space<vmem>>, vector<64x128xbf16>,
      %c0_20 = arith.constant 0 : index
      %c0_21 = arith.constant 0 : index
      %39 = vector.load %arg7[%c0_20, %c0_21] : memref<64x128xf32, #tpu.memory_space<vmem>>, vector<64x128xf32>
      tpu.vector_store %arg7[%c0_20, %c0_21], %36 {strides = array<i32>} : memref<64x128xf32, #tpu.memory_space<vmem>>, vector<64x128xf32>,
    } else {
    }
    %c512_i32 = arith.constant 512 : i32
    %3 = arith.muli %arg1, %c512_i32 : i32
    %4 = tpu.assume_multiple %3, 128 : i32
    %c0 = arith.constant 0 : index
    %5 = arith.index_cast %4 : i32 to index
    %6 = vector.load %arg3[%c0, %5] : memref<128x512xbf16, #tpu.memory_space<vmem>>, vector<128x512xbf16>
    %c0_1 = arith.constant 0 : index
    %7 = arith.index_cast %4 : i32 to index
    %8 = vector.load %arg4[%c0_1, %7] : memref<1x512xf32, #tpu.memory_space<vmem>>, vector<1x512xf32>
    %9 = arith.index_cast %4 : i32 to index
    %c0_2 = arith.constant 0 : index
    %10 = vector.load %arg5[%9, %c0_2] : memref<512x128xbf16, #tpu.memory_space<vmem>>, vector<512x128xbf16>
    %c0_3 = arith.constant 0 : index
    %c0_4 = arith.constant 0 : index
    %11 = vector.load %arg8[%c0_3, %c0_4] : memref<64x128xbf16, #tpu.memory_space<vmem>>, vector<64x128xbf16>
    %cst = arith.constant dense<0.000000e+00> : vector<64x512xf32>
    %12 = tpu.matmul %11, %6, %cst {dimension_numbers = #tpu.dot_dimension_numbers<[1], [0], [0], [1], [0, 0, 1, 1], [], []>} : vector<64x128xbf16>, vector<128x512xbf16>, vector<64x512xf32> -> vector<64x512xf32>
    %13 = vector.broadcast %8 : vector<1x512xf32> to vector<64x512xf32>
    %14 = arith.addf %12, %13 : vector<64x512xf32>
    %15 = arith.mulf %14, %14 : vector<64x512xf32>
    %16 = arith.mulf %14, %15 : vector<64x512xf32>
    %cst_5 = arith.constant 4.471500e-02 : f32
    %17 = vector.broadcast %cst_5 : f32 to vector<64x512xf32>
    %18 = arith.mulf %17, %16 : vector<64x512xf32>
    %19 = arith.addf %14, %18 : vector<64x512xf32>
    %cst_6 = arith.constant 0.797884583 : f32
    %20 = vector.broadcast %cst_6 : f32 to vector<64x512xf32>
    %21 = arith.mulf %20, %19 : vector<64x512xf32>
    %22 = math.tanh %21 : vector<64x512xf32>
    %cst_7 = arith.constant 1.000000e+00 : f32
    %23 = vector.broadcast %cst_7 : f32 to vector<64x512xf32>
    %24 = arith.addf %23, %22 : vector<64x512xf32>
    %cst_8 = arith.constant 5.000000e-01 : f32
    %25 = vector.broadcast %cst_8 : f32 to vector<64x512xf32>
    %26 = arith.mulf %25, %24 : vector<64x512xf32>
    %27 = arith.mulf %14, %26 : vector<64x512xf32>
    %c0_9 = arith.constant 0 : index
    %c0_10 = arith.constant 0 : index
    %28 = vector.load %arg7[%c0_9, %c0_10] : memref<64x128xf32, #tpu.memory_space<vmem>>, vector<64x128xf32>
    %29 = arith.truncf %27 : vector<64x512xf32> to vector<64x512xbf16>
    %cst_11 = arith.constant dense<0.000000e+00> : vector<64x128xf32>
    %30 = tpu.matmul %29, %10, %cst_11 {dimension_numbers = #tpu.dot_dimension_numbers<[1], [0], [0], [1], [0, 0, 1, 1], [], []>} : vector<64x512xbf16>, vector<512x128xbf16>, vector<64x128xf32> -> vector<64x128xf32>
    %31 = arith.addf %28, %30 : vector<64x128xf32>
    %c0_12 = arith.constant 0 : index
    %c0_13 = arith.constant 0 : index
    %32 = vector.load %arg7[%c0_12, %c0_13] : memref<64x128xf32, #tpu.memory_space<vmem>>, vector<64x128xf32>
    tpu.vector_store %arg7[%c0_12, %c0_13], %31 {strides = array<i32>} : memref<64x128xf32, #tpu.memory_space<vmem>>, vector<64x128xf32>,
    %c0_i32_14 = arith.constant 0 : i32
    %33 = arith.cmpi eq, %arg1, %c0_i32_14 : i32
    %34 = arith.extui %33 : i1 to i32
    %c0_i32_15 = arith.constant 0 : i32
    %35 = arith.cmpi ne, %34, %c0_i32_15 : i32
    scf.if %35 {
      %c0_16 = arith.constant 0 : index
      %c0_17 = arith.constant 0 : index
      %36 = vector.load %arg7[%c0_16, %c0_17] : memref<64x128xf32, #tpu.memory_space<vmem>>, vector<64x128xf32>
      %c0_18 = arith.constant 0 : index
      %c0_19 = arith.constant 0 : index
      %37 = vector.load %arg6[%c0_18, %c0_19] : memref<1x128xf32, #tpu.memory_space<vmem>>, vector<1x128xf32>
      %38 = vector.broadcast %37 : vector<1x128xf32> to vector<64x128xf32>
      %39 = arith.addf %36, %38 : vector<64x128xf32>
      %c0_20 = arith.constant 0 : index
      %c0_21 = arith.constant 0 : index
      %40 = vector.load %arg7[%c0_20, %c0_21] : memref<64x128xf32, #tpu.memory_space<vmem>>, vector<64x128xf32>
      tpu.vector_store %arg7[%c0_20, %c0_21], %39 {strides = array<i32>} : memref<64x128xf32, #tpu.memory_space<vmem>>, vector<64x128xf32>,
    } else {
    }
    return
  }
  func.func @transform_0(%arg0: i32, %arg1: i32) -> (i32, i32) {
    %c0_i32 = arith.constant 0 : i32
    %c0_i32_0 = arith.constant 0 : i32
    return %arg0, %c0_i32 : i32, i32
  }
  func.func @transform_1(%arg0: i32, %arg1: i32) -> (i32, i32) {
    %c0_i32 = arith.constant 0 : i32
    %c0_i32_0 = arith.constant 0 : i32
    %c0_i32_1 = arith.constant 0 : i32
    return %c0_i32, %c0_i32_0 : i32, i32
  }
  func.func @transform_2(%arg0: i32, %arg1: i32) -> (i32, i32) {
    %c0_i32 = arith.constant 0 : i32
    %c0_i32_0 = arith.constant 0 : i32
    %c0_i32_1 = arith.constant 0 : i32
    return %c0_i32, %c0_i32_0 : i32, i32
  }
  func.func @transform_3(%arg0: i32, %arg1: i32) -> (i32, i32) {
    %c0_i32 = arith.constant 0 : i32
    %c0_i32_0 = arith.constant 0 : i32
    %c0_i32_1 = arith.constant 0 : i32
    return %c0_i32, %c0_i32_0 : i32, i32
  }
  func.func @transform_4(%arg0: i32, %arg1: i32) -> (i32, i32) {
    %c0_i32 = arith.constant 0 : i32
    %c0_i32_0 = arith.constant 0 : i32
    %c0_i32_1 = arith.constant 0 : i32
    return %c0_i32, %c0_i32_0 : i32, i32
  }
  func.func @transform_5(%arg0: i32, %arg1: i32) -> (i32, i32) {
    %c0_i32 = arith.constant 0 : i32
    %c0_i32_0 = arith.constant 0 : i32
    return %arg0, %c0_i32 : i32, i32
  }
}

</mosaic_0001>

<llo_original>
// kernel: tpu_custom_call.1
$region0: #{tpu_custom_call.1}
  #allocation0 [shape = 'u32[]', space=smem, size = 0x4, offset = 0x4, fixed_abs, tag = 'smem constant byte address 0x4 - core index']
  #allocation1 [shape = 'u32[144,128]{1,0:T(1,128)}', space=vmem, size = 0x12000, scoped, tag = 'internal scratch']
  #allocation2 [shape = 'bf16[64,128]{1,0:T(16,128)(2,1)}', space=vmem, size = 0x4000, scoped, tag = 'scratch operand']
  %s0 = inlined_call_operand.hbm [shape: f32[64,128], index: 0, kind: input, shape index: {}]
  %s1 = inlined_call_operand.hbm [shape: bf16[128,512], index: 1, kind: input, shape index: {}]
  %s2 = inlined_call_operand.hbm [shape: f32[1,512], index: 2, kind: input, shape index: {}]
  %s3 = inlined_call_operand.hbm [shape: bf16[512,128], index: 3, kind: input, shape index: {}]
  %s4 = inlined_call_operand.hbm [shape: f32[1,128], index: 4, kind: input, shape index: {}]
  %s5 = inlined_call_operand.hbm [shape: f32[64,128], index: 5, kind: output, shape index: {}]
  %s6 = sld [smem:[#allocation0]]
  $region58: #{tpu_custom_call.1} parent=0
    _
  %s8 = ssub.s32 1, %s6
  %s9 = scalar_select 0, %s8, %s6
  $region1: #{tpu_custom_call.1} parent=0
    #allocation3 [shape = 'u8[32768]{0}', space=vmem, size = 0x8000, scoped, tag = 'input window, operand 0, single buffered']
    #allocation4 [shape = 's32[1]{0}', space=sflag, size = 0x4, scoped, tag = 'scoped memory for tpu_custom_call.1']
    #allocation5 [shape = 's32[1]{0}', space=sflag, size = 0x4, scoped, tag = 'scoped memory for tpu_custom_call.1']
    #allocation6 [shape = 'u8[131072]{0}', space=vmem, size = 0x20000, scoped, tag = 'input window, operand 1, single buffered']
    #allocation7 [shape = 's32[1]{0}', space=sflag, size = 0x4, scoped, tag = 'scoped memory for tpu_custom_call.1']
    #allocation8 [shape = 'u8[2048]{0}', space=vmem, size = 0x800, scoped, tag = 'input window, operand 2, single buffered']
    #allocation9 [shape = 'u8[131072]{0}', space=vmem, size = 0x20000, scoped, tag = 'input window, operand 3, single buffered']
    #allocation10 [shape = 's32[1]{0}', space=sflag, size = 0x4, scoped, tag = 'scoped memory for tpu_custom_call.1']
    #allocation11 [shape = 'u8[512]{0}', space=vmem, size = 0x400, scoped, tag = 'input window, operand 4, single buffered']
    #allocation12 [shape = 'u8[32768]{0}', space=vmem, size = 0x8000, scoped, tag = 'output window, operand 0, single buffered']
    %10 = vsyncpa [#allocation4], 0
    %11 = vsyncpa [#allocation7], 0
    %12 = vsyncpa [#allocation10], 0
    %13 = vsyncpa [#allocation5], 0
    // Predicated region
    $region2: #{tpu_custom_call.1} parent=1 // pred_check
      _
    $region3: #{tpu_custom_call.1} parent=1 // pred_check_branch
      %15 = sbr.rel (0) target = $region5
    $region4: #{tpu_custom_call.1} parent=1 // pred_region
      %s17 = ssub.s32 1024, 1024
      %18 = vsyncadd [#allocation4], %s17
      %s19 = sshll.u32 [#allocation3], 4
      %s20 = int_to_ptr.vmem [resolvable:$true] %s19
      %25 = dma.hbm_to_vmem [thread:$0]  %s0, 1024, %s20, [#allocation4], 128, 128, 8
    $region5: #{tpu_custom_call.1} parent=1 // pred_fallthru
      _
    // Predicated region
    $region6: #{tpu_custom_call.1} parent=1 // pred_check
      _
    $region7: #{tpu_custom_call.1} parent=1 // pred_check_branch
      %27 = sbr.rel (0) target = $region9
    $region8: #{tpu_custom_call.1} parent=1 // pred_region
      %s29 = ssub.s32 4096, 4096
      %30 = vsyncadd [#allocation7], %s29
      %s31 = sshll.u32 [#allocation6], 4
      %s32 = int_to_ptr.vmem [resolvable:$true] %s31
      %37 = dma.hbm_to_vmem [thread:$0]  %s1, 4096, %s32, [#allocation7], 256, 256, 16
    $region9: #{tpu_custom_call.1} parent=1 // pred_fallthru
      _
    // Predicated region
    $region10: #{tpu_custom_call.1} parent=1 // pred_check
      _
    $region11: #{tpu_custom_call.1} parent=1 // pred_check_branch
      %39 = sbr.rel (0) target = $region13
    $region12: #{tpu_custom_call.1} parent=1 // pred_region
      %s41 = ssub.s32 64, 64
      %42 = vsyncadd [#allocation7], %s41
      %s44 = sshll.u32 [#allocation8], 4
      %s45 = int_to_ptr.vmem [resolvable:$true] %s44
      %47 = dma.hbm_to_vmem [thread:$0]  %s2, 64, %s45, [#allocation7]
    $region13: #{tpu_custom_call.1} parent=1 // pred_fallthru
      _
    // Predicated region
    $region14: #{tpu_custom_call.1} parent=1 // pred_check
      _
    $region15: #{tpu_custom_call.1} parent=1 // pred_check_branch
      %49 = sbr.rel (0) target = $region17
    $region16: #{tpu_custom_call.1} parent=1 // pred_region
      %s51 = ssub.s32 4096, 4096
      %52 = vsyncadd [#allocation10], %s51
      %s53 = sshll.u32 [#allocation9], 4
      %s54 = int_to_ptr.vmem [resolvable:$true] %s53
      %59 = dma.hbm_to_vmem [thread:$0]  %s3, 4096, %s54, [#allocation10], 64, 64, 4
    $region17: #{tpu_custom_call.1} parent=1 // pred_fallthru
      _
    // Predicated region
    $region18: #{tpu_custom_call.1} parent=1 // pred_check
      _
    $region19: #{tpu_custom_call.1} parent=1 // pred_check_branch
      %61 = sbr.rel (0) target = $region21
    $region20: #{tpu_custom_call.1} parent=1 // pred_region
      %s63 = ssub.s32 16, 16
      %64 = vsyncadd [#allocation10], %s63
      %s66 = sshll.u32 [#allocation11], 4
      %s67 = int_to_ptr.vmem [resolvable:$true] %s66
      %69 = dma.hbm_to_vmem [thread:$0]  %s4, 16, %s67, [#allocation10]
    $region21: #{tpu_custom_call.1} parent=1 // pred_fallthru
      _
    // Predicated region
    $region22: #{tpu_custom_call.1} parent=1 // pred_check
      _
    $region23: #{tpu_custom_call.1} parent=1 // pred_check_branch
      %71 = sbr.rel (0) target = $region25
    $region24: #{tpu_custom_call.1} parent=1 // pred_region
      %72 = dma.done [#allocation4], 1024
    $region25: #{tpu_custom_call.1} parent=1 // pred_fallthru
      _
    // Predicated region
    $region26: #{tpu_custom_call.1} parent=1 // pred_check
      _
    $region27: #{tpu_custom_call.1} parent=1 // pred_check_branch
      %74 = sbr.rel (0) target = $region29
    $region28: #{tpu_custom_call.1} parent=1 // pred_region
      %75 = dma.done [#allocation7], 4096
    $region29: #{tpu_custom_call.1} parent=1 // pred_fallthru
      _
    // Predicated region
    $region30: #{tpu_custom_call.1} parent=1 // pred_check
      _
    $region31: #{tpu_custom_call.1} parent=1 // pred_check_branch
      %77 = sbr.rel (0) target = $region33
    $region32: #{tpu_custom_call.1} parent=1 // pred_region
      %78 = dma.done [#allocation7], 64
    $region33: #{tpu_custom_call.1} parent=1 // pred_fallthru
      _
    // Predicated region
    $region34: #{tpu_custom_call.1} parent=1 // pred_check
      _
    $region35: #{tpu_custom_call.1} parent=1 // pred_check_branch
      %80 = sbr.rel (0) target = $region37
    $region36: #{tpu_custom_call.1} parent=1 // pred_region
      %81 = dma.done [#allocation10], 4096
    $region37: #{tpu_custom_call.1} parent=1 // pred_fallthru
      _
    // Predicated region
    $region38: #{tpu_custom_call.1} parent=1 // pred_check
      _
    $region39: #{tpu_custom_call.1} parent=1 // pred_check_branch
      %83 = sbr.rel (0) target = $region41
    $region40: #{tpu_custom_call.1} parent=1 // pred_region
      %84 = dma.done [#allocation10], 16
    $region41: #{tpu_custom_call.1} parent=1 // pred_fallthru
      _
    %p86 = scmp.eq.s32.totalorder 0, 0
    // Predicated region
    $region42: #{tpu_custom_call.1} parent=1 // pred_check
      %p87 = pneg %p86
    $region43: #{tpu_custom_call.1} parent=1 // pred_check_branch
      %89 = sbr.rel (%p87) target = $region45
    $region44: #{tpu_custom_call.1} parent=1 // pred_region
      %v90 = vld [vmem:[#allocation3] sm:$0xff]
      %v91 = vld [vmem:[#allocation3 + $0x8] sm:$0xff]
      %v92 = vld [vmem:[#allocation3 + $0x10] sm:$0xff]
      %v93 = vld [vmem:[#allocation3 + $0x18] sm:$0xff]
      %v94 = vld [vmem:[#allocation3 + $0x20] sm:$0xff]
      %v95 = vld [vmem:[#allocation3 + $0x28] sm:$0xff]
      %v96 = vld [vmem:[#allocation3 + $0x30] sm:$0xff]
      %v97 = vld [vmem:[#allocation3 + $0x38] sm:$0xff]
      %v98 = vpack.c.bf16 %v91, %v90
      %v99 = vpack.c.bf16 %v93, %v92
      %v100 = vpack.c.bf16 %v95, %v94
      %v101 = vpack.c.bf16 %v97, %v96
      %102 = vst [vmem:[#allocation2] sm:$0xff] %v98
      %103 = vst [vmem:[#allocation2 + $0x8] sm:$0xff] %v99
      %104 = vst [vmem:[#allocation2 + $0x10] sm:$0xff] %v100
      %105 = vst [vmem:[#allocation2 + $0x18] sm:$0xff] %v101
      %106 = vst [vmem:[#allocation12] sm:$0xff] %v90
      %107 = vst [vmem:[#allocation12 + $0x8] sm:$0xff] %v91
      %108 = vst [vmem:[#allocation12 + $0x10] sm:$0xff] %v92
      %109 = vst [vmem:[#allocation12 + $0x18] sm:$0xff] %v93
      %110 = vst [vmem:[#allocation12 + $0x20] sm:$0xff] %v94
      %111 = vst [vmem:[#allocation12 + $0x28] sm:$0xff] %v95
      %112 = vst [vmem:[#allocation12 + $0x30] sm:$0xff] %v96
      %113 = vst [vmem:[#allocation12 + $0x38] sm:$0xff] %v97
    $region45: #{tpu_custom_call.1} parent=1 // pred_fallthru
      _
    %s114 = smul.u32 0, 512
    %s115 = sshra.s32 %s114, 7
    %s116 = sand.u32 %s114, 127
    %s117 = smul.addr %s115, 4
    %s118 = scalar_lea.vmem [#allocation6], %s117
    %v119 = vld [vmem:[%s118] sm:$0xff]
    %v120 = vld [vmem:[%s118 + $0x8] sm:$0xff]
    %v121 = vld [vmem:[%s118 + $0x10] sm:$0xff]
    %v122 = vld [vmem:[%s118 + $0x18] sm:$0xff]
    %v123 = vld [vmem:[%s118 + $0x20] sm:$0xff]
    %v124 = vld [vmem:[%s118 + $0x28] sm:$0xff]
    %v125 = vld [vmem:[%s118 + $0x30] sm:$0xff]
    %v126 = vld [vmem:[%s118 + $0x38] sm:$0xff]
    %v127 = vld [vmem:[%s118 + $0x40] sm:$0xff]
    %v128 = vld [vmem:[%s118 + $0x48] sm:$0xff]
    %v129 = vld [vmem:[%s118 + $0x50] sm:$0xff]
    %v130 = vld [vmem:[%s118 + $0x58] sm:$0xff]
    %v131 = vld [vmem:[%s118 + $0x60] sm:$0xff]
    %v132 = vld [vmem:[%s118 + $0x68] sm:$0xff]
    %v133 = vld [vmem:[%s118 + $0x70] sm:$0xff]
    %v134 = vld [vmem:[%s118 + $0x78] sm:$0xff]
    %v135 = vld [vmem:[%s118 + $0x80] sm:$0xff]
    %v136 = vld [vmem:[%s118 + $0x88] sm:$0xff]
    %v137 = vld [vmem:[%s118 + $0x90] sm:$0xff]
    %v138 = vld [vmem:[%s118 + $0x98] sm:$0xff]
    %v139 = vld [vmem:[%s118 + $0xa0] sm:$0xff]
    %v140 = vld [vmem:[%s118 + $0xa8] sm:$0xff]
    %v141 = vld [vmem:[%s118 + $0xb0] sm:$0xff]
    %v142 = vld [vmem:[%s118 + $0xb8] sm:$0xff]
    %v143 = vld [vmem:[%s118 + $0xc0] sm:$0xff]
    %v144 = vld [vmem:[%s118 + $0xc8] sm:$0xff]
    %v145 = vld [vmem:[%s118 + $0xd0] sm:$0xff]
    %v146 = vld [vmem:[%s118 + $0xd8] sm:$0xff]
    %v147 = vld [vmem:[%s118 + $0xe0] sm:$0xff]
    %v148 = vld [vmem:[%s118 + $0xe8] sm:$0xff]
    %v149 = vld [vmem:[%s118 + $0xf0] sm:$0xff]
    %v150 = vld [vmem:[%s118 + $0xf8] sm:$0xff]
    %s151 = scalar_lea.vmem [#allocation8], %s115
    %v152 = vld [vmem:[%s151] sm:$0xf]
    %s153 = sshra.s32 %s114, 3
    %s154 = sand.u32 %s114, 7
    %s155 = smul.addr %s153, 4
    %s156 = scalar_lea.vmem [#allocation9], %s155
    %v157 = vld [vmem:[%s156] sm:$0xf]
    %v158 = vld [vmem:[%s156 + $0x4] sm:$0xf]
    %v159 = vld [vmem:[%s156 + $0x8] sm:$0xf]
    %v160 = vld [vmem:[%s156 + $0xc] sm:$0xf]
    %v161 = vld [vmem:[%s156 + $0x10] sm:$0xf]
    %v162 = vld [vmem:[%s156 + $0x14] sm:$0xf]
    %v163 = vld [vmem:[%s156 + $0x18] sm:$0xf]
    %v164 = vld [vmem:[%s156 + $0x1c] sm:$0xf]
    %v165 = vld [vmem:[%s156 + $0x20] sm:$0xf]
    %v166 = vld [vmem:[%s156 + $0x24] sm:$0xf]
    %v167 = vld [vmem:[%s156 + $0x28] sm:$0xf]
    %v168 = vld [vmem:[%s156 + $0x2c] sm:$0xf]
    %v169 = vld [vmem:[%s156 + $0x30] sm:$0xf]
    %v170 = vld [vmem:[%s156 + $0x34] sm:$0xf]
    %v171 = vld [vmem:[%s156 + $0x38] sm:$0xf]
    %v172 = vld [vmem:[%s156 + $0x3c] sm:$0xf]
    %v173 = vld [vmem:[%s156 + $0x40] sm:$0xf]
    %v174 = vld [vmem:[%s156 + $0x44] sm:$0xf]
    %v175 = vld [vmem:[%s156 + $0x48] sm:$0xf]
    %v176 = vld [vmem:[%s156 + $0x4c] sm:$0xf]
    %v177 = vld [vmem:[%s156 + $0x50] sm:$0xf]
    %v178 = vld [vmem:[%s156 + $0x54] sm:$0xf]
    %v179 = vld [vmem:[%s156 + $0x58] sm:$0xf]
    %v180 = vld [vmem:[%s156 + $0x5c] sm:$0xf]
    %v181 = vld [vmem:[%s156 + $0x60] sm:$0xf]
    %v182 = vld [vmem:[%s156 + $0x64] sm:$0xf]
    %v183 = vld [vmem:[%s156 + $0x68] sm:$0xf]
    %v184 = vld [vmem:[%s156 + $0x6c] sm:$0xf]
    %v185 = vld [vmem:[%s156 + $0x70] sm:$0xf]
    %v186 = vld [vmem:[%s156 + $0x74] sm:$0xf]
    %v187 = vld [vmem:[%s156 + $0x78] sm:$0xf]
    %v188 = vld [vmem:[%s156 + $0x7c] sm:$0xf]
    %v189 = vld [vmem:[%s156 + $0x80] sm:$0xf]
    %v190 = vld [vmem:[%s156 + $0x84] sm:$0xf]
    %v191 = vld [vmem:[%s156 + $0x88] sm:$0xf]
    %v192 = vld [vmem:[%s156 + $0x8c] sm:$0xf]
    %v193 = vld [vmem:[%s156 + $0x90] sm:$0xf]
    %v194 = vld [vmem:[%s156 + $0x94] sm:$0xf]
    %v195 = vld [vmem:[%s156 + $0x98] sm:$0xf]
    %v196 = vld [vmem:[%s156 + $0x9c] sm:$0xf]
    %v197 = vld [vmem:[%s156 + $0xa0] sm:$0xf]
    %v198 = vld [vmem:[%s156 + $0xa4] sm:$0xf]
    %v199 = vld [vmem:[%s156 + $0xa8] sm:$0xf]
    %v200 = vld [vmem:[%s156 + $0xac] sm:$0xf]
    %v201 = vld [vmem:[%s156 + $0xb0] sm:$0xf]
    %v202 = vld [vmem:[%s156 + $0xb4] sm:$0xf]
    %v203 = vld [vmem:[%s156 + $0xb8] sm:$0xf]
    %v204 = vld [vmem:[%s156 + $0xbc] sm:$0xf]
    %v205 = vld [vmem:[%s156 + $0xc0] sm:$0xf]
    %v206 = vld [vmem:[%s156 + $0xc4] sm:$0xf]
    %v207 = vld [vmem:[%s156 + $0xc8] sm:$0xf]
    %v208 = vld [vmem:[%s156 + $0xcc] sm:$0xf]
    %v209 = vld [vmem:[%s156 + $0xd0] sm:$0xf]
    %v210 = vld [vmem:[%s156 + $0xd4] sm:$0xf]
    %v211 = vld [vmem:[%s156 + $0xd8] sm:$0xf]
    %v212 = vld [vmem:[%s156 + $0xdc] sm:$0xf]
    %v213 = vld [vmem:[%s156 + $0xe0] sm:$0xf]
    %v214 = vld [vmem:[%s156 + $0xe4] sm:$0xf]
    %v215 = vld [vmem:[%s156 + $0xe8] sm:$0xf]
    %v216 = vld [vmem:[%s156 + $0xec] sm:$0xf]
    %v217 = vld [vmem:[%s156 + $0xf0] sm:$0xf]
    %v218 = vld [vmem:[%s156 + $0xf4] sm:$0xf]
    %v219 = vld [vmem:[%s156 + $0xf8] sm:$0xf]
    %v220 = vld [vmem:[%s156 + $0xfc] sm:$0xf]
    %v221 = vld [vmem:[#allocation2] sm:$0xff]
    %v222 = vld [vmem:[#allocation2 + $0x8] sm:$0xff]
    %v223 = vld [vmem:[#allocation2 + $0x10] sm:$0xff]
    %v224 = vld [vmem:[#allocation2 + $0x18] sm:$0xff]
    %v226 = vlaneseq
    %v227 = vshrl.u32 %v226, 7
    %v228 = vsub.s32 0, %v227
    %v229 = vrot.slane %v152, %v228
    %v230 = vlaneseq
    %v231 = vshrl.u32 %v230, 7
    %v232 = vsub.s32 1, %v231
    %v233 = vrot.slane %v152, %v232
    %v234 = vlaneseq
    %v235 = vshrl.u32 %v234, 7
    %v236 = vsub.s32 2, %v235
    %v237 = vrot.slane %v152, %v236
    %v238 = vlaneseq
    %v239 = vshrl.u32 %v238, 7
    %v240 = vsub.s32 3, %v239
    %v241 = vrot.slane %v152, %v240
    %v278 = vunpack.c.l.b16 %v119
    %v279 = vunpack.c.h.b16 %v119
    %v280 = vunpack.c.l.b16 %v120
    %v281 = vunpack.c.h.b16 %v120
    %v282 = vunpack.c.l.b16 %v121
    %v283 = vunpack.c.h.b16 %v121
    %v284 = vunpack.c.l.b16 %v122
    %v285 = vunpack.c.h.b16 %v122
    %v286 = vunpack.c.l.b16 %v123
    %v287 = vunpack.c.h.b16 %v123
    %v288 = vunpack.c.l.b16 %v124
    %v289 = vunpack.c.h.b16 %v124
    %v290 = vunpack.c.l.b16 %v125
    %v291 = vunpack.c.h.b16 %v125
    %v292 = vunpack.c.l.b16 %v126
    %v293 = vunpack.c.h.b16 %v126
    %v294 = vunpack.c.l.b16 %v127
    %v295 = vunpack.c.h.b16 %v127
    %v296 = vunpack.c.l.b16 %v128
    %v297 = vunpack.c.h.b16 %v128
    %v298 = vunpack.c.l.b16 %v129
    %v299 = vunpack.c.h.b16 %v129
    %v300 = vunpack.c.l.b16 %v130
    %v301 = vunpack.c.h.b16 %v130
    %v302 = vunpack.c.l.b16 %v131
    %v303 = vunpack.c.h.b16 %v131
    %v304 = vunpack.c.l.b16 %v132
    %v305 = vunpack.c.h.b16 %v132
    %v306 = vunpack.c.l.b16 %v133
    %v307 = vunpack.c.h.b16 %v133
    %v308 = vunpack.c.l.b16 %v134
    %v309 = vunpack.c.h.b16 %v134
    %v310 = vunpack.c.l.b16 %v135
    %v311 = vunpack.c.h.b16 %v135
    %v312 = vunpack.c.l.b16 %v136
    %v313 = vunpack.c.h.b16 %v136
    %v314 = vunpack.c.l.b16 %v137
    %v315 = vunpack.c.h.b16 %v137
    %v316 = vunpack.c.l.b16 %v138
    %v317 = vunpack.c.h.b16 %v138
    %v318 = vunpack.c.l.b16 %v139
    %v319 = vunpack.c.h.b16 %v139
    %v320 = vunpack.c.l.b16 %v140
    %v321 = vunpack.c.h.b16 %v140
    %v322 = vunpack.c.l.b16 %v141
    %v323 = vunpack.c.h.b16 %v141
    %v324 = vunpack.c.l.b16 %v142
    %v325 = vunpack.c.h.b16 %v142
    %v326 = vunpack.c.l.b16 %v143
    %v327 = vunpack.c.h.b16 %v143
    %v328 = vunpack.c.l.b16 %v144
    %v329 = vunpack.c.h.b16 %v144
    %v330 = vunpack.c.l.b16 %v145
    %v331 = vunpack.c.h.b16 %v145
    %v332 = vunpack.c.l.b16 %v146
    %v333 = vunpack.c.h.b16 %v146
    %v334 = vunpack.c.l.b16 %v147
    %v335 = vunpack.c.h.b16 %v147
    %v336 = vunpack.c.l.b16 %v148
    %v337 = vunpack.c.h.b16 %v148
    %v338 = vunpack.c.l.b16 %v149
    %v339 = vunpack.c.h.b16 %v149
    %v340 = vunpack.c.l.b16 %v150
    %v341 = vunpack.c.h.b16 %v150
    %v342 = vpack.c.b16 %v282, %v278
    %v343 = vpack.c.b16 %v283, %v279
    %v344 = vpack.c.b16 %v284, %v280
    %v345 = vpack.c.b16 %v285, %v281
    %v346 = vpack.c.b16 %v290, %v286
    %v347 = vpack.c.b16 %v291, %v287
    %v348 = vpack.c.b16 %v292, %v288
    %v349 = vpack.c.b16 %v293, %v289
    %v350 = vpack.c.b16 %v298, %v294
    %v351 = vpack.c.b16 %v299, %v295
    %v352 = vpack.c.b16 %v300, %v296
    %v353 = vpack.c.b16 %v301, %v297
    %v354 = vpack.c.b16 %v306, %v302
    %v355 = vpack.c.b16 %v307, %v303
    %v356 = vpack.c.b16 %v308, %v304
    %v357 = vpack.c.b16 %v309, %v305
    %v358 = vpack.c.b16 %v314, %v310
    %v359 = vpack.c.b16 %v315, %v311
    %v360 = vpack.c.b16 %v316, %v312
    %v361 = vpack.c.b16 %v317, %v313
    %v362 = vpack.c.b16 %v322, %v318
    %v363 = vpack.c.b16 %v323, %v319
    %v364 = vpack.c.b16 %v324, %v320
    %v365 = vpack.c.b16 %v325, %v321
    %v366 = vpack.c.b16 %v330, %v326
    %v367 = vpack.c.b16 %v331, %v327
    %v368 = vpack.c.b16 %v332, %v328
    %v369 = vpack.c.b16 %v333, %v329
    %v370 = vpack.c.b16 %v338, %v334
    %v371 = vpack.c.b16 %v339, %v335
    %v372 = vpack.c.b16 %v340, %v336
    %v373 = vpack.c.b16 %v341, %v337
    %406 = vmatprep.subr.bf16.mxu0 %v343
    %407 = vmatpush1.bf16.msra.mxu0 %v342
    %408 = vmatprep.subr.bf16.mxu0 %v347
    %409 = vmatpush1.bf16.msra.mxu0 %v346
    %410 = vmatprep.subr.bf16.mxu0 %v351
    %411 = vmatpush1.bf16.msra.mxu0 %v350
    %412 = vmatprep.subr.bf16.mxu0 %v355
    %413 = vmatpush1.bf16.msra.mxu0 %v354
    %414 = vmatprep.subr.bf16.mxu0 %v359
    %415 = vmatpush1.bf16.msra.mxu0 %v358
    %416 = vmatprep.subr.bf16.mxu0 %v363
    %417 = vmatpush1.bf16.msra.mxu0 %v362
    %418 = vmatprep.subr.bf16.mxu0 %v367
    %419 = vmatpush1.bf16.msra.mxu0 %v366
    %420 = vmatprep.subr.bf16.mxu0 %v371
    %421 = vmatpush1.bf16.msra.mxu0 %v370
    %422 = vmatprep.subr.bf16.mxu0 0
    %423 = vmatpush1.bf16.msra.mxu0 0
    %424 = vmatprep.subr.bf16.mxu0 0
    %425 = vmatpush1.bf16.msra.mxu0 0
    %426 = vmatprep.subr.bf16.mxu0 0
    %427 = vmatpush1.bf16.msra.mxu0 0
    %428 = vmatprep.subr.bf16.mxu0 0
    %429 = vmatpush1.bf16.msra.mxu0 0
    %430 = vmatprep.subr.bf16.mxu0 0
    %431 = vmatpush1.bf16.msra.mxu0 0
    %432 = vmatprep.subr.bf16.mxu0 0
    %433 = vmatpush1.bf16.msra.mxu0 0
    %434 = vmatprep.subr.bf16.mxu0 0
    %435 = vmatpush1.bf16.msra.mxu0 0
    %436 = vmatprep.subr.bf16.mxu0 0
    %437 = vmatpush1.bf16.msra.mxu0 0
    %438 = vmatprep.mubr.bf16.mxu0 0
    %439 = vmatmul.mubr.bf16.gmra.mrb[0].mxu0 %v221
    %v440 = vpop.f32.mrb[0].mxu0
    %v441 = vadd.f32 %v229, %v440
    %v442 = vpop.f32.mrb[0].mxu0
    %v443 = vadd.f32 %v233, %v442
    %v444 = vpop.f32.mrb[0].mxu0
    %v445 = vadd.f32 %v229, %v444
    %v446 = vpop.f32.mrb[0].mxu0
    %v447 = vadd.f32 %v233, %v446
    %448 = vmatprep.mubr.bf16.mxu0 0
    %449 = vmatmul.mubr.bf16.gmra.mrb[0].mxu0 %v222
    %v450 = vpop.f32.mrb[0].mxu0
    %v451 = vadd.f32 %v229, %v450
    %v452 = vpop.f32.mrb[0].mxu0
    %v453 = vadd.f32 %v233, %v452
    %v454 = vpop.f32.mrb[0].mxu0
    %v455 = vadd.f32 %v229, %v454
    %v456 = vpop.f32.mrb[0].mxu0
    %v457 = vadd.f32 %v233, %v456
    %458 = vmatprep.mubr.bf16.mxu0 0
    %459 = vmatmul.mubr.bf16.gmra.mrb[0].mxu0 %v223
    %v460 = vpop.f32.mrb[0].mxu0
    %v461 = vadd.f32 %v229, %v460
    %v462 = vpop.f32.mrb[0].mxu0
    %v463 = vadd.f32 %v233, %v462
    %v464 = vpop.f32.mrb[0].mxu0
    %v465 = vadd.f32 %v229, %v464
    %v466 = vpop.f32.mrb[0].mxu0
    %v467 = vadd.f32 %v233, %v466
    %468 = vmatprep.mubr.bf16.mxu0 0
    %469 = vmatmul.mubr.bf16.gmra.mrb[0].mxu0 %v224
    %v470 = vpop.f32.mrb[0].mxu0
    %v471 = vadd.f32 %v229, %v470
    %v472 = vpop.f32.mrb[0].mxu0
    %v473 = vadd.f32 %v233, %v472
    %v474 = vpop.f32.mrb[0].mxu0
    %v475 = vadd.f32 %v229, %v474
    %v476 = vpop.f32.mrb[0].mxu0
    %v477 = vadd.f32 %v233, %v476
    %478 = vdwg.mxu0
    %479 = vmatprep.subr.bf16.mxu0 %v345
    %480 = vmatpush1.bf16.msra.mxu0 %v344
    %481 = vmatprep.subr.bf16.mxu0 %v349
    %482 = vmatpush1.bf16.msra.mxu0 %v348
    %483 = vmatprep.subr.bf16.mxu0 %v353
    %484 = vmatpush1.bf16.msra.mxu0 %v352
    %485 = vmatprep.subr.bf16.mxu0 %v357
    %486 = vmatpush1.bf16.msra.mxu0 %v356
    %487 = vmatprep.subr.bf16.mxu0 %v361
    %488 = vmatpush1.bf16.msra.mxu0 %v360
    %489 = vmatprep.subr.bf16.mxu0 %v365
    %490 = vmatpush1.bf16.msra.mxu0 %v364
    %491 = vmatprep.subr.bf16.mxu0 %v369
    %492 = vmatpush1.bf16.msra.mxu0 %v368
    %493 = vmatprep.subr.bf16.mxu0 %v373
    %494 = vmatpush1.bf16.msra.mxu0 %v372
    %495 = vmatprep.subr.bf16.mxu0 0
    %496 = vmatpush1.bf16.msra.mxu0 0
    %497 = vmatprep.subr.bf16.mxu0 0
    %498 = vmatpush1.bf16.msra.mxu0 0
    %499 = vmatprep.subr.bf16.mxu0 0
    %500 = vmatpush1.bf16.msra.mxu0 0
    %501 = vmatprep.subr.bf16.mxu0 0
    %502 = vmatpush1.bf16.msra.mxu0 0
    %503 = vmatprep.subr.bf16.mxu0 0
    %504 = vmatpush1.bf16.msra.mxu0 0
    %505 = vmatprep.subr.bf16.mxu0 0
    %506 = vmatpush1.bf16.msra.mxu0 0
    %507 = vmatprep.subr.bf16.mxu0 0
    %508 = vmatpush1.bf16.msra.mxu0 0
    %509 = vmatprep.subr.bf16.mxu0 0
    %510 = vmatpush1.bf16.msra.mxu0 0
    %511 = vmatprep.mubr.bf16.mxu0 0
    %512 = vmatmul.mubr.bf16.gmra.mrb[0].mxu0 %v221
    %v513 = vpop.f32.mrb[0].mxu0
    %v514 = vadd.f32 %v237, %v513
    %v515 = vpop.f32.mrb[0].mxu0
    %v516 = vadd.f32 %v241, %v515
    %v517 = vpop.f32.mrb[0].mxu0
    %v518 = vadd.f32 %v237, %v517
    %v519 = vpop.f32.mrb[0].mxu0
    %v520 = vadd.f32 %v241, %v519
    %521 = vmatprep.mubr.bf16.mxu0 0
    %522 = vmatmul.mubr.bf16.gmra.mrb[0].mxu0 %v222
    %v523 = vpop.f32.mrb[0].mxu0
    %v524 = vadd.f32 %v237, %v523
    %v525 = vpop.f32.mrb[0].mxu0
    %v526 = vadd.f32 %v241, %v525
    %v527 = vpop.f32.mrb[0].mxu0
    %v528 = vadd.f32 %v237, %v527
    %v529 = vpop.f32.mrb[0].mxu0
    %v530 = vadd.f32 %v241, %v529
    %531 = vmatprep.mubr.bf16.mxu0 0
    %532 = vmatmul.mubr.bf16.gmra.mrb[0].mxu0 %v223
    %v533 = vpop.f32.mrb[0].mxu0
    %v534 = vadd.f32 %v237, %v533
    %v535 = vpop.f32.mrb[0].mxu0
    %v536 = vadd.f32 %v241, %v535
    %v537 = vpop.f32.mrb[0].mxu0
    %v538 = vadd.f32 %v237, %v537
    %v539 = vpop.f32.mrb[0].mxu0
    %v540 = vadd.f32 %v241, %v539
    %541 = vmatprep.mubr.bf16.mxu0 0
    %542 = vmatmul.mubr.bf16.gmra.mrb[0].mxu0 %v224
    %v543 = vpop.f32.mrb[0].mxu0
    %v544 = vadd.f32 %v237, %v543
    %v545 = vpop.f32.mrb[0].mxu0
    %v546 = vadd.f32 %v241, %v545
    %v547 = vpop.f32.mrb[0].mxu0
    %v548 = vadd.f32 %v237, %v547
    %v549 = vpop.f32.mrb[0].mxu0
    %v550 = vadd.f32 %v241, %v549
    %551 = vdwg.mxu0
    %v552 = vmul.f32 %v441, %v441
    %v553 = vmul.f32 %v443, %v443
    %v554 = vmul.f32 %v514, %v514
    %v555 = vmul.f32 %v516, %v516
    %v556 = vmul.f32 %v445, %v445
    %v557 = vmul.f32 %v447, %v447
    %v558 = vmul.f32 %v518, %v518
    %v559 = vmul.f32 %v520, %v520
    %v560 = vmul.f32 %v451, %v451
    %v561 = vmul.f32 %v453, %v453
    %v562 = vmul.f32 %v524, %v524
    %v563 = vmul.f32 %v526, %v526
    %v564 = vmul.f32 %v455, %v455
    %v565 = vmul.f32 %v457, %v457
    %v566 = vmul.f32 %v528, %v528
    %v567 = vmul.f32 %v530, %v530
    %v568 = vmul.f32 %v461, %v461
    %v569 = vmul.f32 %v463, %v463
    %v570 = vmul.f32 %v534, %v534
    %v571 = vmul.f32 %v536, %v536
    %v572 = vmul.f32 %v465, %v465
    %v573 = vmul.f32 %v467, %v467
    %v574 = vmul.f32 %v538, %v538
    %v575 = vmul.f32 %v540, %v540
    %v576 = vmul.f32 %v471, %v471
    %v577 = vmul.f32 %v473, %v473
    %v578 = vmul.f32 %v544, %v544
    %v579 = vmul.f32 %v546, %v546
    %v580 = vmul.f32 %v475, %v475
    %v581 = vmul.f32 %v477, %v477
    %v582 = vmul.f32 %v548, %v548
    %v583 = vmul.f32 %v550, %v550
    %v584 = vmul.f32 %v441, %v552
    %v585 = vmul.f32 %v443, %v553
    %v586 = vmul.f32 %v514, %v554
    %v587 = vmul.f32 %v516, %v555
    %v588 = vmul.f32 %v445, %v556
    %v589 = vmul.f32 %v447, %v557
    %v590 = vmul.f32 %v518, %v558
    %v591 = vmul.f32 %v520, %v559
    %v592 = vmul.f32 %v451, %v560
    %v593 = vmul.f32 %v453, %v561
    %v594 = vmul.f32 %v524, %v562
    %v595 = vmul.f32 %v526, %v563
    %v596 = vmul.f32 %v455, %v564
    %v597 = vmul.f32 %v457, %v565
    %v598 = vmul.f32 %v528, %v566
    %v599 = vmul.f32 %v530, %v567
    %v600 = vmul.f32 %v461, %v568
    %v601 = vmul.f32 %v463, %v569
    %v602 = vmul.f32 %v534, %v570
    %v603 = vmul.f32 %v536, %v571
    %v604 = vmul.f32 %v465, %v572
    %v605 = vmul.f32 %v467, %v573
    %v606 = vmul.f32 %v538, %v574
    %v607 = vmul.f32 %v540, %v575
    %v608 = vmul.f32 %v471, %v576
    %v609 = vmul.f32 %v473, %v577
    %v610 = vmul.f32 %v544, %v578
    %v611 = vmul.f32 %v546, %v579
    %v612 = vmul.f32 %v475, %v580
    %v613 = vmul.f32 %v477, %v581
    %v614 = vmul.f32 %v548, %v582
    %v615 = vmul.f32 %v550, %v583
    %v616 = vmul.f32 %v584, 0.044715
    %v617 = vmul.f32 %v585, 0.044715
    %v618 = vmul.f32 %v586, 0.044715
    %v619 = vmul.f32 %v587, 0.044715
    %v620 = vmul.f32 %v588, 0.044715
    %v621 = vmul.f32 %v589, 0.044715
    %v622 = vmul.f32 %v590, 0.044715
    %v623 = vmul.f32 %v591, 0.044715
    %v624 = vmul.f32 %v592, 0.044715
    %v625 = vmul.f32 %v593, 0.044715
    %v626 = vmul.f32 %v594, 0.044715
    %v627 = vmul.f32 %v595, 0.044715
    %v628 = vmul.f32 %v596, 0.044715
    %v629 = vmul.f32 %v597, 0.044715
    %v630 = vmul.f32 %v598, 0.044715
    %v631 = vmul.f32 %v599, 0.044715
    %v632 = vmul.f32 %v600, 0.044715
    %v633 = vmul.f32 %v601, 0.044715
    %v634 = vmul.f32 %v602, 0.044715
    %v635 = vmul.f32 %v603, 0.044715
    %v636 = vmul.f32 %v604, 0.044715
    %v637 = vmul.f32 %v605, 0.044715
    %v638 = vmul.f32 %v606, 0.044715
    %v639 = vmul.f32 %v607, 0.044715
    %v640 = vmul.f32 %v608, 0.044715
    %v641 = vmul.f32 %v609, 0.044715
    %v642 = vmul.f32 %v610, 0.044715
    %v643 = vmul.f32 %v611, 0.044715
    %v644 = vmul.f32 %v612, 0.044715
    %v645 = vmul.f32 %v613, 0.044715
    %v646 = vmul.f32 %v614, 0.044715
    %v647 = vmul.f32 %v615, 0.044715
    %v648 = vadd.f32 %v441, %v616
    %v649 = vadd.f32 %v443, %v617
    %v650 = vadd.f32 %v514, %v618
    %v651 = vadd.f32 %v516, %v619
    %v652 = vadd.f32 %v445, %v620
    %v653 = vadd.f32 %v447, %v621
    %v654 = vadd.f32 %v518, %v622
    %v655 = vadd.f32 %v520, %v623
    %v656 = vadd.f32 %v451, %v624
    %v657 = vadd.f32 %v453, %v625
    %v658 = vadd.f32 %v524, %v626
    %v659 = vadd.f32 %v526, %v627
    %v660 = vadd.f32 %v455, %v628
    %v661 = vadd.f32 %v457, %v629
    %v662 = vadd.f32 %v528, %v630
    %v663 = vadd.f32 %v530, %v631
    %v664 = vadd.f32 %v461, %v632
    %v665 = vadd.f32 %v463, %v633
    %v666 = vadd.f32 %v534, %v634
    %v667 = vadd.f32 %v536, %v635
    %v668 = vadd.f32 %v465, %v636
    %v669 = vadd.f32 %v467, %v637
    %v670 = vadd.f32 %v538, %v638
    %v671 = vadd.f32 %v540, %v639
    %v672 = vadd.f32 %v471, %v640
    %v673 = vadd.f32 %v473, %v641
    %v674 = vadd.f32 %v544, %v642
    %v675 = vadd.f32 %v546, %v643
    %v676 = vadd.f32 %v475, %v644
    %v677 = vadd.f32 %v477, %v645
    %v678 = vadd.f32 %v548, %v646
    %v679 = vadd.f32 %v550, %v647
    %v680 = vmul.f32 %v648, 0.7978846
    %v681 = vmul.f32 %v649, 0.7978846
    %v682 = vmul.f32 %v650, 0.7978846
    %v683 = vmul.f32 %v651, 0.7978846
    %v684 = vmul.f32 %v652, 0.7978846
    %v685 = vmul.f32 %v653, 0.7978846
    %v686 = vmul.f32 %v654, 0.7978846
    %v687 = vmul.f32 %v655, 0.7978846
    %v688 = vmul.f32 %v656, 0.7978846
    %v689 = vmul.f32 %v657, 0.7978846
    %v690 = vmul.f32 %v658, 0.7978846
    %v691 = vmul.f32 %v659, 0.7978846
    %v692 = vmul.f32 %v660, 0.7978846
    %v693 = vmul.f32 %v661, 0.7978846
    %v694 = vmul.f32 %v662, 0.7978846
    %v695 = vmul.f32 %v663, 0.7978846
    %v696 = vmul.f32 %v664, 0.7978846
    %v697 = vmul.f32 %v665, 0.7978846
    %v698 = vmul.f32 %v666, 0.7978846
    %v699 = vmul.f32 %v667, 0.7978846
    %v700 = vmul.f32 %v668, 0.7978846
    %v701 = vmul.f32 %v669, 0.7978846
    %v702 = vmul.f32 %v670, 0.7978846
    %v703 = vmul.f32 %v671, 0.7978846
    %v704 = vmul.f32 %v672, 0.7978846
    %v705 = vmul.f32 %v673, 0.7978846
    %v706 = vmul.f32 %v674, 0.7978846
    %v707 = vmul.f32 %v675, 0.7978846
    %v708 = vmul.f32 %v676, 0.7978846
    %v709 = vmul.f32 %v677, 0.7978846
    %v710 = vmul.f32 %v678, 0.7978846
    %v711 = vmul.f32 %v679, 0.7978846
    %v712 = vtanh.pop %v680
    %v713 = vtanh.pop %v681
    %v714 = vtanh.pop %v682
    %v715 = vtanh.pop %v683
    %v716 = vtanh.pop %v684
    %v717 = vtanh.pop %v685
    %v718 = vtanh.pop %v686
    %v719 = vtanh.pop %v687
    %v720 = vtanh.pop %v688
    %v721 = vtanh.pop %v689
    %v722 = vtanh.pop %v690
    %v723 = vtanh.pop %v691
    %v724 = vtanh.pop %v692
    %v725 = vtanh.pop %v693
    %v726 = vtanh.pop %v694
    %v727 = vtanh.pop %v695
    %v728 = vtanh.pop %v696
    %v729 = vtanh.pop %v697
    %v730 = vtanh.pop %v698
    %v731 = vtanh.pop %v699
    %v732 = vtanh.pop %v700
    %v733 = vtanh.pop %v701
    %v734 = vtanh.pop %v702
    %v735 = vtanh.pop %v703
    %v736 = vtanh.pop %v704
    %v737 = vtanh.pop %v705
    %v738 = vtanh.pop %v706
    %v739 = vtanh.pop %v707
    %v740 = vtanh.pop %v708
    %v741 = vtanh.pop %v709
    %v742 = vtanh.pop %v710
    %v743 = vtanh.pop %v711
    %v744 = vadd.f32 %v712, 1.0
    %v745 = vadd.f32 %v713, 1.0
    %v746 = vadd.f32 %v714, 1.0
    %v747 = vadd.f32 %v715, 1.0
    %v748 = vadd.f32 %v716, 1.0
    %v749 = vadd.f32 %v717, 1.0
    %v750 = vadd.f32 %v718, 1.0
    %v751 = vadd.f32 %v719, 1.0
    %v752 = vadd.f32 %v720, 1.0
    %v753 = vadd.f32 %v721, 1.0
    %v754 = vadd.f32 %v722, 1.0
    %v755 = vadd.f32 %v723, 1.0
    %v756 = vadd.f32 %v724, 1.0
    %v757 = vadd.f32 %v725, 1.0
    %v758 = vadd.f32 %v726, 1.0
    %v759 = vadd.f32 %v727, 1.0
    %v760 = vadd.f32 %v728, 1.0
    %v761 = vadd.f32 %v729, 1.0
    %v762 = vadd.f32 %v730, 1.0
    %v763 = vadd.f32 %v731, 1.0
    %v764 = vadd.f32 %v732, 1.0
    %v765 = vadd.f32 %v733, 1.0
    %v766 = vadd.f32 %v734, 1.0
    %v767 = vadd.f32 %v735, 1.0
    %v768 = vadd.f32 %v736, 1.0
    %v769 = vadd.f32 %v737, 1.0
    %v770 = vadd.f32 %v738, 1.0
    %v771 = vadd.f32 %v739, 1.0
    %v772 = vadd.f32 %v740, 1.0
    %v773 = vadd.f32 %v741, 1.0
    %v774 = vadd.f32 %v742, 1.0
    %v775 = vadd.f32 %v743, 1.0
    %v776 = vmul.f32 %v744, 0.5
    %v777 = vmul.f32 %v745, 0.5
    %v778 = vmul.f32 %v746, 0.5
    %v779 = vmul.f32 %v747, 0.5
    %v780 = vmul.f32 %v748, 0.5
    %v781 = vmul.f32 %v749, 0.5
    %v782 = vmul.f32 %v750, 0.5
    %v783 = vmul.f32 %v751, 0.5
    %v784 = vmul.f32 %v752, 0.5
    %v785 = vmul.f32 %v753, 0.5
    %v786 = vmul.f32 %v754, 0.5
    %v787 = vmul.f32 %v755, 0.5
    %v788 = vmul.f32 %v756, 0.5
    %v789 = vmul.f32 %v757, 0.5
    %v790 = vmul.f32 %v758, 0.5
    %v791 = vmul.f32 %v759, 0.5
    %v792 = vmul.f32 %v760, 0.5
    %v793 = vmul.f32 %v761, 0.5
    %v794 = vmul.f32 %v762, 0.5
    %v795 = vmul.f32 %v763, 0.5
    %v796 = vmul.f32 %v764, 0.5
    %v797 = vmul.f32 %v765, 0.5
    %v798 = vmul.f32 %v766, 0.5
    %v799 = vmul.f32 %v767, 0.5
    %v800 = vmul.f32 %v768, 0.5
    %v801 = vmul.f32 %v769, 0.5
    %v802 = vmul.f32 %v770, 0.5
    %v803 = vmul.f32 %v771, 0.5
    %v804 = vmul.f32 %v772, 0.5
    %v805 = vmul.f32 %v773, 0.5
    %v806 = vmul.f32 %v774, 0.5
    %v807 = vmul.f32 %v775, 0.5
    %v808 = vmul.f32 %v441, %v776
    %v809 = vmul.f32 %v443, %v777
    %v810 = vmul.f32 %v514, %v778
    %v811 = vmul.f32 %v516, %v779
    %v812 = vmul.f32 %v445, %v780
    %v813 = vmul.f32 %v447, %v781
    %v814 = vmul.f32 %v518, %v782
    %v815 = vmul.f32 %v520, %v783
    %v816 = vmul.f32 %v451, %v784
    %v817 = vmul.f32 %v453, %v785
    %v818 = vmul.f32 %v524, %v786
    %v819 = vmul.f32 %v526, %v787
    %v820 = vmul.f32 %v455, %v788
    %v821 = vmul.f32 %v457, %v789
    %v822 = vmul.f32 %v528, %v790
    %v823 = vmul.f32 %v530, %v791
    %v824 = vmul.f32 %v461, %v792
    %v825 = vmul.f32 %v463, %v793
    %v826 = vmul.f32 %v534, %v794
    %v827 = vmul.f32 %v536, %v795
    %v828 = vmul.f32 %v465, %v796
    %v829 = vmul.f32 %v467, %v797
    %v830 = vmul.f32 %v538, %v798
    %v831 = vmul.f32 %v540, %v799
    %v832 = vmul.f32 %v471, %v800
    %v833 = vmul.f32 %v473, %v801
    %v834 = vmul.f32 %v544, %v802
    %v835 = vmul.f32 %v546, %v803
    %v836 = vmul.f32 %v475, %v804
    %v837 = vmul.f32 %v477, %v805
    %v838 = vmul.f32 %v548, %v806
    %v839 = vmul.f32 %v550, %v807
    %v840 = vld [vmem:[#allocation12] sm:$0xff]
    %v841 = vld [vmem:[#allocation12 + $0x8] sm:$0xff]
    %v842 = vld [vmem:[#allocation12 + $0x10] sm:$0xff]
    %v843 = vld [vmem:[#allocation12 + $0x18] sm:$0xff]
    %v844 = vld [vmem:[#allocation12 + $0x20] sm:$0xff]
    %v845 = vld [vmem:[#allocation12 + $0x28] sm:$0xff]
    %v846 = vld [vmem:[#allocation12 + $0x30] sm:$0xff]
    %v847 = vld [vmem:[#allocation12 + $0x38] sm:$0xff]
    %v848 = vpack.c.bf16 %v812, %v808
    %v849 = vpack.c.bf16 %v813, %v809
    %v850 = vpack.c.bf16 %v814, %v810
    %v851 = vpack.c.bf16 %v815, %v811
    %v852 = vpack.c.bf16 %v820, %v816
    %v853 = vpack.c.bf16 %v821, %v817
    %v854 = vpack.c.bf16 %v822, %v818
    %v855 = vpack.c.bf16 %v823, %v819
    %v856 = vpack.c.bf16 %v828, %v824
    %v857 = vpack.c.bf16 %v829, %v825
    %v858 = vpack.c.bf16 %v830, %v826
    %v859 = vpack.c.bf16 %v831, %v827
    %v860 = vpack.c.bf16 %v836, %v832
    %v861 = vpack.c.bf16 %v837, %v833
    %v862 = vpack.c.bf16 %v838, %v834
    %v863 = vpack.c.bf16 %v839, %v835
    %v928 = vunpack.c.l.b16 %v157
    %v929 = vunpack.c.l.b16 %v158
    %v930 = vunpack.c.l.b16 %v159
    %v931 = vunpack.c.l.b16 %v160
    %v932 = vunpack.c.l.b16 %v161
    %v933 = vunpack.c.l.b16 %v162
    %v934 = vunpack.c.l.b16 %v163
    %v935 = vunpack.c.l.b16 %v164
    %v936 = vunpack.c.l.b16 %v165
    %v937 = vunpack.c.l.b16 %v166
    %v938 = vunpack.c.l.b16 %v167
    %v939 = vunpack.c.l.b16 %v168
    %v940 = vunpack.c.l.b16 %v169
    %v941 = vunpack.c.l.b16 %v170
    %v942 = vunpack.c.l.b16 %v171
    %v943 = vunpack.c.l.b16 %v172
    %v944 = vunpack.c.l.b16 %v173
    %v945 = vunpack.c.l.b16 %v174
    %v946 = vunpack.c.l.b16 %v175
    %v947 = vunpack.c.l.b16 %v176
    %v948 = vunpack.c.l.b16 %v177
    %v949 = vunpack.c.l.b16 %v178
    %v950 = vunpack.c.l.b16 %v179
    %v951 = vunpack.c.l.b16 %v180
    %v952 = vunpack.c.l.b16 %v181
    %v953 = vunpack.c.l.b16 %v182
    %v954 = vunpack.c.l.b16 %v183
    %v955 = vunpack.c.l.b16 %v184
    %v956 = vunpack.c.l.b16 %v185
    %v957 = vunpack.c.l.b16 %v186
    %v958 = vunpack.c.l.b16 %v187
    %v959 = vunpack.c.l.b16 %v188
    %v960 = vunpack.c.l.b16 %v189
    %v961 = vunpack.c.l.b16 %v190
    %v962 = vunpack.c.l.b16 %v191
    %v963 = vunpack.c.l.b16 %v192
    %v964 = vunpack.c.l.b16 %v193
    %v965 = vunpack.c.l.b16 %v194
    %v966 = vunpack.c.l.b16 %v195
    %v967 = vunpack.c.l.b16 %v196
    %v968 = vunpack.c.l.b16 %v197
    %v969 = vunpack.c.l.b16 %v198
    %v970 = vunpack.c.l.b16 %v199
    %v971 = vunpack.c.l.b16 %v200
    %v972 = vunpack.c.l.b16 %v201
    %v973 = vunpack.c.l.b16 %v202
    %v974 = vunpack.c.l.b16 %v203
    %v975 = vunpack.c.l.b16 %v204
    %v976 = vunpack.c.l.b16 %v205
    %v977 = vunpack.c.l.b16 %v206
    %v978 = vunpack.c.l.b16 %v207
    %v979 = vunpack.c.l.b16 %v208
    %v980 = vunpack.c.l.b16 %v209
    %v981 = vunpack.c.l.b16 %v210
    %v982 = vunpack.c.l.b16 %v211
    %v983 = vunpack.c.l.b16 %v212
    %v984 = vunpack.c.l.b16 %v213
    %v985 = vunpack.c.l.b16 %v214
    %v986 = vunpack.c.l.b16 %v215
    %v987 = vunpack.c.l.b16 %v216
    %v988 = vunpack.c.l.b16 %v217
    %v989 = vunpack.c.l.b16 %v218
    %v990 = vunpack.c.l.b16 %v219
    %v991 = vunpack.c.l.b16 %v220
    %v992 = vpack.c.b16 %v929, %v928
    %v993 = vpack.c.b16 %v931, %v930
    %v994 = vpack.c.b16 %v933, %v932
    %v995 = vpack.c.b16 %v935, %v934
    %v996 = vpack.c.b16 %v937, %v936
    %v997 = vpack.c.b16 %v939, %v938
    %v998 = vpack.c.b16 %v941, %v940
    %v999 = vpack.c.b16 %v943, %v942
    %v1000 = vpack.c.b16 %v945, %v944
    %v1001 = vpack.c.b16 %v947, %v946
    %v1002 = vpack.c.b16 %v949, %v948
    %v1003 = vpack.c.b16 %v951, %v950
    %v1004 = vpack.c.b16 %v953, %v952
    %v1005 = vpack.c.b16 %v955, %v954
    %v1006 = vpack.c.b16 %v957, %v956
    %v1007 = vpack.c.b16 %v959, %v958
    %v1008 = vpack.c.b16 %v961, %v960
    %v1009 = vpack.c.b16 %v963, %v962
    %v1010 = vpack.c.b16 %v965, %v964
    %v1011 = vpack.c.b16 %v967, %v966
    %v1012 = vpack.c.b16 %v969, %v968
    %v1013 = vpack.c.b16 %v971, %v970
    %v1014 = vpack.c.b16 %v973, %v972
    %v1015 = vpack.c.b16 %v975, %v974
    %v1016 = vpack.c.b16 %v977, %v976
    %v1017 = vpack.c.b16 %v979, %v978
    %v1018 = vpack.c.b16 %v981, %v980
    %v1019 = vpack.c.b16 %v983, %v982
    %v1020 = vpack.c.b16 %v985, %v984
    %v1021 = vpack.c.b16 %v987, %v986
    %v1022 = vpack.c.b16 %v989, %v988
    %v1023 = vpack.c.b16 %v991, %v990
    %1056 = vmatprep.subr.bf16.mxu0 0
    %1057 = vmatpush1.bf16.msra.mxu0 %v992
    %1058 = vmatprep.subr.bf16.mxu0 0
    %1059 = vmatpush1.bf16.msra.mxu0 %v993
    %1060 = vmatprep.subr.bf16.mxu0 0
    %1061 = vmatpush1.bf16.msra.mxu0 %v994
    %1062 = vmatprep.subr.bf16.mxu0 0
    %1063 = vmatpush1.bf16.msra.mxu0 %v995
    %1064 = vmatprep.subr.bf16.mxu0 0
    %1065 = vmatpush1.bf16.msra.mxu0 %v996
    %1066 = vmatprep.subr.bf16.mxu0 0
    %1067 = vmatpush1.bf16.msra.mxu0 %v997
    %1068 = vmatprep.subr.bf16.mxu0 0
    %1069 = vmatpush1.bf16.msra.mxu0 %v998
    %1070 = vmatprep.subr.bf16.mxu0 0
    %1071 = vmatpush1.bf16.msra.mxu0 %v999
    %1072 = vmatprep.subr.bf16.mxu0 0
    %1073 = vmatpush1.bf16.msra.mxu0 %v1000
    %1074 = vmatprep.subr.bf16.mxu0 0
    %1075 = vmatpush1.bf16.msra.mxu0 %v1001
    %1076 = vmatprep.subr.bf16.mxu0 0
    %1077 = vmatpush1.bf16.msra.mxu0 %v1002
    %1078 = vmatprep.subr.bf16.mxu0 0
    %1079 = vmatpush1.bf16.msra.mxu0 %v1003
    %1080 = vmatprep.subr.bf16.mxu0 0
    %1081 = vmatpush1.bf16.msra.mxu0 %v1004
    %1082 = vmatprep.subr.bf16.mxu0 0
    %1083 = vmatpush1.bf16.msra.mxu0 %v1005
    %1084 = vmatprep.subr.bf16.mxu0 0
    %1085 = vmatpush1.bf16.msra.mxu0 %v1006
    %1086 = vmatprep.subr.bf16.mxu0 0
    %1087 = vmatpush1.bf16.msra.mxu0 %v1007
    %1088 = vmatprep.mubr.bf16.mxu0 %v849
    %1089 = vmatmul.mubr.bf16.gmra.mrb[0].mxu0 %v848
    %v1090 = vpop.f32.mrb[0].mxu0
    %v1091 = vadd.f32 0.0, %v1090
    %v1092 = vpop.f32.mrb[0].mxu0
    %v1093 = vpop.f32.mrb[0].mxu0
    %v1094 = vadd.f32 0.0, %v1093
    %v1095 = vpop.f32.mrb[0].mxu0
    %1096 = vmatprep.mubr.bf16.mxu0 %v853
    %1097 = vmatmul.mubr.bf16.gmra.mrb[0].mxu0 %v852
    %v1098 = vpop.f32.mrb[0].mxu0
    %v1099 = vadd.f32 0.0, %v1098
    %v1100 = vpop.f32.mrb[0].mxu0
    %v1101 = vpop.f32.mrb[0].mxu0
    %v1102 = vadd.f32 0.0, %v1101
    %v1103 = vpop.f32.mrb[0].mxu0
    %1104 = vmatprep.mubr.bf16.mxu0 %v857
    %1105 = vmatmul.mubr.bf16.gmra.mrb[0].mxu0 %v856
    %v1106 = vpop.f32.mrb[0].mxu0
    %v1107 = vadd.f32 0.0, %v1106
    %v1108 = vpop.f32.mrb[0].mxu0
    %v1109 = vpop.f32.mrb[0].mxu0
    %v1110 = vadd.f32 0.0, %v1109
    %v1111 = vpop.f32.mrb[0].mxu0
    %1112 = vmatprep.mubr.bf16.mxu0 %v861
    %1113 = vmatmul.mubr.bf16.gmra.mrb[0].mxu0 %v860
    %v1114 = vpop.f32.mrb[0].mxu0
    %v1115 = vadd.f32 0.0, %v1114
    %v1116 = vpop.f32.mrb[0].mxu0
    %v1117 = vpop.f32.mrb[0].mxu0
    %v1118 = vadd.f32 0.0, %v1117
    %v1119 = vpop.f32.mrb[0].mxu0
    %1120 = vdwg.mxu0
    %1121 = vmatprep.subr.bf16.mxu0 0
    %1122 = vmatpush1.bf16.msra.mxu0 %v1008
    %1123 = vmatprep.subr.bf16.mxu0 0
    %1124 = vmatpush1.bf16.msra.mxu0 %v1009
    %1125 = vmatprep.subr.bf16.mxu0 0
    %1126 = vmatpush1.bf16.msra.mxu0 %v1010
    %1127 = vmatprep.subr.bf16.mxu0 0
    %1128 = vmatpush1.bf16.msra.mxu0 %v1011
    %1129 = vmatprep.subr.bf16.mxu0 0
    %1130 = vmatpush1.bf16.msra.mxu0 %v1012
    %1131 = vmatprep.subr.bf16.mxu0 0
    %1132 = vmatpush1.bf16.msra.mxu0 %v1013
    %1133 = vmatprep.subr.bf16.mxu0 0
    %1134 = vmatpush1.bf16.msra.mxu0 %v1014
    %1135 = vmatprep.subr.bf16.mxu0 0
    %1136 = vmatpush1.bf16.msra.mxu0 %v1015
    %1137 = vmatprep.subr.bf16.mxu0 0
    %1138 = vmatpush1.bf16.msra.mxu0 %v1016
    %1139 = vmatprep.subr.bf16.mxu0 0
    %1140 = vmatpush1.bf16.msra.mxu0 %v1017
    %1141 = vmatprep.subr.bf16.mxu0 0
    %1142 = vmatpush1.bf16.msra.mxu0 %v1018
    %1143 = vmatprep.subr.bf16.mxu0 0
    %1144 = vmatpush1.bf16.msra.mxu0 %v1019
    %1145 = vmatprep.subr.bf16.mxu0 0
    %1146 = vmatpush1.bf16.msra.mxu0 %v1020
    %1147 = vmatprep.subr.bf16.mxu0 0
    %1148 = vmatpush1.bf16.msra.mxu0 %v1021
    %1149 = vmatprep.subr.bf16.mxu0 0
    %1150 = vmatpush1.bf16.msra.mxu0 %v1022
    %1151 = vmatprep.subr.bf16.mxu0 0
    %1152 = vmatpush1.bf16.msra.mxu0 %v1023
    %1153 = vmatprep.mubr.bf16.mxu0 %v851
    %1154 = vmatmul.mubr.bf16.gmra.mrb[0].mxu0 %v850
    %v1155 = vpop.f32.mrb[0].mxu0
    %v1156 = vadd.f32 %v1091, %v1155
    %v1157 = vpop.f32.mrb[0].mxu0
    %v1158 = vpop.f32.mrb[0].mxu0
    %v1159 = vadd.f32 %v1094, %v1158
    %v1160 = vpop.f32.mrb[0].mxu0
    %1161 = vmatprep.mubr.bf16.mxu0 %v855
    %1162 = vmatmul.mubr.bf16.gmra.mrb[0].mxu0 %v854
    %v1163 = vpop.f32.mrb[0].mxu0
    %v1164 = vadd.f32 %v1099, %v1163
    %v1165 = vpop.f32.mrb[0].mxu0
    %v1166 = vpop.f32.mrb[0].mxu0
    %v1167 = vadd.f32 %v1102, %v1166
    %v1168 = vpop.f32.mrb[0].mxu0
    %1169 = vmatprep.mubr.bf16.mxu0 %v859
    %1170 = vmatmul.mubr.bf16.gmra.mrb[0].mxu0 %v858
    %v1171 = vpop.f32.mrb[0].mxu0
    %v1172 = vadd.f32 %v1107, %v1171
    %v1173 = vpop.f32.mrb[0].mxu0
    %v1174 = vpop.f32.mrb[0].mxu0
    %v1175 = vadd.f32 %v1110, %v1174
    %v1176 = vpop.f32.mrb[0].mxu0
    %1177 = vmatprep.mubr.bf16.mxu0 %v863
    %1178 = vmatmul.mubr.bf16.gmra.mrb[0].mxu0 %v862
    %v1179 = vpop.f32.mrb[0].mxu0
    %v1180 = vadd.f32 %v1115, %v1179
    %v1181 = vpop.f32.mrb[0].mxu0
    %v1182 = vpop.f32.mrb[0].mxu0
    %v1183 = vadd.f32 %v1118, %v1182
    %v1184 = vpop.f32.mrb[0].mxu0
    %1185 = vdwg.mxu0
    %v1186 = vadd.f32 %v840, %v1156
    %v1187 = vadd.f32 %v841, %v1159
    %v1188 = vadd.f32 %v842, %v1164
    %v1189 = vadd.f32 %v843, %v1167
    %v1190 = vadd.f32 %v844, %v1172
    %v1191 = vadd.f32 %v845, %v1175
    %v1192 = vadd.f32 %v846, %v1180
    %v1193 = vadd.f32 %v847, %v1183
    %1194 = vst [vmem:[#allocation12] sm:$0xff] %v1186
    %1195 = vst [vmem:[#allocation12 + $0x8] sm:$0xff] %v1187
    %1196 = vst [vmem:[#allocation12 + $0x10] sm:$0xff] %v1188
    %1197 = vst [vmem:[#allocation12 + $0x18] sm:$0xff] %v1189
    %1198 = vst [vmem:[#allocation12 + $0x20] sm:$0xff] %v1190
    %1199 = vst [vmem:[#allocation12 + $0x28] sm:$0xff] %v1191
    %1200 = vst [vmem:[#allocation12 + $0x30] sm:$0xff] %v1192
    %1201 = vst [vmem:[#allocation12 + $0x38] sm:$0xff] %v1193
    // Predicated region
    $region46: #{tpu_custom_call.1} parent=1 // pred_check
      %p1202 = pneg %p86
    $region47: #{tpu_custom_call.1} parent=1 // pred_check_branch
      %1204 = sbr.rel (%p1202) target = $region49
    $region48: #{tpu_custom_call.1} parent=1 // pred_region
      %v1205 = vld [vmem:[#allocation12] sm:$0xff]
      %v1206 = vld [vmem:[#allocation12 + $0x8] sm:$0xff]
      %v1207 = vld [vmem:[#allocation12 + $0x10] sm:$0xff]
      %v1208 = vld [vmem:[#allocation12 + $0x18] sm:$0xff]
      %v1209 = vld [vmem:[#allocation12 + $0x20] sm:$0xff]
      %v1210 = vld [vmem:[#allocation12 + $0x28] sm:$0xff]
      %v1211 = vld [vmem:[#allocation12 + $0x30] sm:$0xff]
      %v1212 = vld [vmem:[#allocation12 + $0x38] sm:$0xff]
      %v1213 = vld [vmem:[#allocation11] sm:$0x1]
      %v1215 = vlaneseq
      %v1216 = vshrl.u32 %v1215, 7
      %v1217 = vsub.s32 0, %v1216
      %v1218 = vrot.slane %v1213, %v1217
      %v1220 = vadd.f32 %v1205, %v1218
      %v1221 = vadd.f32 %v1206, %v1218
      %v1222 = vadd.f32 %v1207, %v1218
      %v1223 = vadd.f32 %v1208, %v1218
      %v1224 = vadd.f32 %v1209, %v1218
      %v1225 = vadd.f32 %v1210, %v1218
      %v1226 = vadd.f32 %v1211, %v1218
      %v1227 = vadd.f32 %v1212, %v1218
      %1228 = vst [vmem:[#allocation12] sm:$0xff] %v1220
      %1229 = vst [vmem:[#allocation12 + $0x8] sm:$0xff] %v1221
      %1230 = vst [vmem:[#allocation12 + $0x10] sm:$0xff] %v1222
      %1231 = vst [vmem:[#allocation12 + $0x18] sm:$0xff] %v1223
      %1232 = vst [vmem:[#allocation12 + $0x20] sm:$0xff] %v1224
      %1233 = vst [vmem:[#allocation12 + $0x28] sm:$0xff] %v1225
      %1234 = vst [vmem:[#allocation12 + $0x30] sm:$0xff] %v1226
      %1235 = vst [vmem:[#allocation12 + $0x38] sm:$0xff] %v1227
    $region49: #{tpu_custom_call.1} parent=1 // pred_fallthru
      _
    // Predicated region
    $region50: #{tpu_custom_call.1} parent=1 // pred_check
      _
    $region51: #{tpu_custom_call.1} parent=1 // pred_check_branch
      %1237 = sbr.rel (0) target = $region53
    $region52: #{tpu_custom_call.1} parent=1 // pred_region
      %s1239 = ssub.s32 1024, 1024
      %1240 = vsyncadd [#allocation5], %s1239
      %s1241 = sshll.u32 [#allocation12], 4
      %s1242 = int_to_ptr.vmem [resolvable:$true] %s1241
      %1247 = dma.vmem_to_hbm [thread:$0]  %s1242, 1024, %s5, [#allocation5], 128, 128, 8
    $region53: #{tpu_custom_call.1} parent=1 // pred_fallthru
      _
    // Predicated region
    $region54: #{tpu_custom_call.1} parent=1 // pred_check
      _
    $region55: #{tpu_custom_call.1} parent=1 // pred_check_branch
      %1249 = sbr.rel (0) target = $region57
    $region56: #{tpu_custom_call.1} parent=1 // pred_region
      %1250 = dma.done [#allocation5], 1024
    $region57: #{tpu_custom_call.1} parent=1 // pred_fallthru
      _
    %1251 = vsyncpa [#allocation4], 1
    %1252 = vsyncpa [#allocation7], 1
    %1253 = vsyncpa [#allocation10], 1
    %1254 = vsyncpa [#allocation5], 1

</llo_original>
